<compile_context>
chip_gen: v6e
topology: v6e:2x2x1
jax: 0.10.0
libtpu: 0.0.40
codegen_flags: <defaults>
</compile_context>

<pallas_src>
import functools

import jax
import jax.numpy as jnp
from jax import lax
from jax.experimental import pallas as pl
from jax.experimental.pallas import tpu as pltpu

GAMMA_NEG = 4.0   # kernel assumes the module's default integer gammas (4, 1)
GAMMA_POS = 1.0
CLIP = 0.05
EPS = 1e-6
WEIGHT_A = 0.1
WEIGHT_B = 1.0

LANE = 128
SUB = 8
NUM_SPLITS = 2                    # leading "parallel" grid axis (v7x megacore)
MAX_TR = 1024                     # ASL row tile: 1024*128*4 B = 512 KiB / array
TARGET_Z_TILE_BYTES = 1 << 20     # ~1 MiB z tiles -> >85% of HBM roofline
MAX_TP = 8192                     # hard cap on pair-tile lane width


def _round_up(a: int, b: int) -> int:
    return pl.cdiv(a, b) * b


def _make_kernel(num_pairs, tp, n_x_tiles, n_z_tiles, tpc_x, tpc_z, n_steps):
    inv_p = 1.0 / float(num_pairs)

    def kernel(x_ref, y_ref, z_ref, yp_ref, o_ref, acc_asl_ref, acc_pair_ref):
        c = pl.program_id(0)          # core-split index ("parallel")
        p = pl.program_id(1)          # per-core tile step ("arbitrary")

        @pl.when(p == 0)
        def _init():
            acc_asl_ref[...] = jnp.zeros_like(acc_asl_ref)
            acc_pair_ref[...] = jnp.zeros_like(acc_pair_ref)

        # ----------------- AsymmetricLoss: one lane-dense row tile -----------------
        xt = c * tpc_x + p
        @pl.when(jnp.logical_and(p < tpc_x, xt < n_x_tiles))
        def _asl():
            x = x_ref[...].astype(jnp.float32)           # (tr, 128), lane-dense
            y = y_ref[...].astype(jnp.float32)
            xs_pos = jax.nn.sigmoid(x)
            xs_neg = 1.0 - xs_pos
            valid = y != -1.0                            # emulates y != -1 filtering
            xs_neg = jnp.minimum(xs_neg + CLIP, 1.0)     # (xs_neg + clip).clamp(max=1)
            los = (y * jnp.log(jnp.maximum(xs_pos, EPS))
                   + (1.0 - y) * jnp.log(jnp.maximum(xs_neg, EPS)))
            pt = xs_pos * y + xs_neg * (1.0 - y)
            base = 1.0 - pt
            # torch.pow(1-pt, gamma) for gamma_pos=1 / gamma_neg=4: exact integer
            # powers, VPU-only (no EUP pow emulation), finite on masked lanes.
            b2 = base * base
            w = jnp.where(y > 0.5, base, b2 * b2)
            t = jnp.where(valid, los * w, 0.0)
            # Sublane reduce into the (1, 128) accumulator (mostly VPU adds).
            acc_asl_ref[...] += jnp.sum(t, axis=0, keepdims=True)

        # --------------- MultilabelPairLoss: one lane-dense z tile -----------------
        zt = c * tpc_z + p
        @pl.when(jnp.logical_and(p < tpc_z, zt < n_z_tiles))
        def _pair():
            z = z_ref[...].astype(jnp.float32)           # (B, tp) pair-logit tile
            yp = yp_ref[...].astype(jnp.float32)         # (1, tp) targets in {0,1}
            x_max = jnp.max(z, axis=0, keepdims=True)    # max-pool over batch
            # BCEWithLogitsLoss element term, numerically stable form.
            # (log(1+e) instead of log1p to stay on guaranteed Mosaic lowerings.)
            bce = (jnp.maximum(x_max, 0.0) - x_max * yp
                   + jnp.log(1.0 + jnp.exp(-jnp.abs(x_max))))
            # In-kernel validity mask: z / y_pair are NOT padded, so the ragged
            # last tile carries garbage lanes -> must use where, not multiply.
            lane = lax.broadcasted_iota(jnp.int32, (1, tp), 1)
            in_range = (lane + zt * tp) < num_pairs
            # TODO(synk): bce runs at 1/8 sublane occupancy ((1, tp) values); batch
            # 8 tiles of x_max into an (8, tp) scratch if profiling shows it binding.
            acc_pair_ref[...] += jnp.where(in_range, bce, 0.0)

        # ----------------- finalize: per-core weighted partial sum -----------------
        @pl.when(p == n_steps - 1)
        def _fin():
            loss1 = -jnp.sum(acc_asl_ref[...])
            loss2 = jnp.sum(acc_pair_ref[...]) * inv_p
            total = WEIGHT_A * loss1 + WEIGHT_B * loss2
            o_ref[...] = jnp.full((1, SUB, LANE), total, dtype=jnp.float32)

    return kernel


@functools.partial(jax.jit, static_argnames=("max_pair_tile",))
def loss_mixture(x, y, z, *, max_pair_tile=MAX_TP):
    B, C = x.shape
    Bz, P = z.shape
    assert P == C * (C - 1) // 2, "z must carry one logit per unordered class pair"
    max_pair_tile = _round_up(int(max_pair_tile), LANE)

    # Pair targets: min((y0^T y0)[i<j], 1).  O(C^2) plain-JAX glue.
    # TODO(synk): for large C, replace the triu_indices gather with iota-derived
    # (i, j) arithmetic or a dedicated kernel step; gathers are slow on TPU.
    y0 = jnp.maximum(y.astype(jnp.float32), 0.0)          # y[y == -1] = 0
    gram = y0.T @ y0
    i_idx, j_idx = jnp.triu_indices(C, k=1)
    y_pair = jnp.minimum(gram[i_idx, j_idx], 1.0).reshape(1, P)

    # ---- ASL inputs: lane-dense (rows, 128), padded with ignore targets (cheap,
    # x/y are tiny compared with z) and row-tiled into the shared grid axis. ----
    n = B * C
    rows = pl.cdiv(n, LANE)
    tr = min(_round_up(rows, SUB), MAX_TR)
    rows_pad = _round_up(rows, tr)
    n_pad = rows_pad * LANE
    x_flat = jnp.pad(x.reshape(-1), (0, n_pad - n)).reshape(rows_pad, LANE)
    y_flat = jnp.pad(y.reshape(-1), (0, n_pad - n),
                     constant_values=-1).reshape(rows_pad, LANE)
    n_x_tiles = rows_pad // tr

    # ---- pair-logit tiling: z is never padded or copied (dominant HBM stream).
    # Adaptive tile width: ~1 MiB of z per tile, multiple of 128 lanes. ----
    itemsize = z.dtype.itemsize
    tp = max(LANE, (TARGET_Z_TILE_BYTES // (max(Bz, 1) * itemsize)) // LANE * LANE)
    tp = min(tp, _round_up(P, LANE), max_pair_tile)
    n_z_tiles = pl.cdiv(P, tp)

    # ---- split the work across cores (v7x megacore); serial no-op on v5e/v6e ----
    num_splits = min(NUM_SPLITS, max(n_x_tiles, n_z_tiles))
    tpc_x = pl.cdiv(n_x_tiles, num_splits)
    tpc_z = pl.cdiv(n_z_tiles, num_splits)
    n_steps = max(tpc_x, tpc_z, 1)

    def x_map(c, p):
        return (jnp.minimum(c * tpc_x + p, n_x_tiles - 1), 0)

    def z_map(c, p):
        return (0, jnp.minimum(c * tpc_z + p, n_z_tiles - 1))

    grid_spec = pltpu.PrefetchScalarGridSpec(
        num_scalar_prefetch=0,
        grid=(num_splits, n_steps),
        in_specs=[
            pl.BlockSpec((tr, LANE), x_map),     # x, lane-dense row tile
            pl.BlockSpec((tr, LANE), x_map),     # y, lane-dense row tile
            pl.BlockSpec((Bz, tp), z_map),       # z pair-logit tile (ragged last)
            pl.BlockSpec((1, tp), z_map),        # pair-target tile  (ragged last)
        ],
        out_specs=pl.BlockSpec((1, SUB, LANE), lambda c, p: (c, 0, 0)),
        scratch_shapes=[
            pltpu.VMEM((1, LANE), jnp.float32),  # ASL vector accumulator
            pltpu.VMEM((1, tp), jnp.float32),    # pair-BCE vector accumulator
        ],
    )

    out = pl.pallas_call(
        _make_kernel(P, tp, n_x_tiles, n_z_tiles, tpc_x, tpc_z, n_steps),
        out_shape=jax.ShapeDtypeStruct((num_splits, SUB, LANE), jnp.float32),
        grid_spec=grid_spec,
        compiler_params=pltpu.CompilerParams(
            dimension_semantics=("parallel", "arbitrary")),
    )(x_flat, y_flat, z, y_pair)

    # Per-core weighted partial sums -> total loss.
    return jnp.sum(out[:, 0, 0])


def _reference(x, y, z):
    """Pure-JAX reference mirroring the PyTorch forward (default module args)."""
    xs_pos = jax.nn.sigmoid(x)
    xs_neg = 1.0 - xs_pos
    valid = y != -1.0
    xs_neg = jnp.minimum(xs_neg + CLIP, 1.0)
    los = y * jnp.log(jnp.maximum(xs_pos, EPS)) + (1.0 - y) * jnp.log(
        jnp.maximum(xs_neg, EPS))
    pt = xs_pos * y + xs_neg * (1.0 - y)
    gamma = GAMMA_POS * y + GAMMA_NEG * (1.0 - y)
    w = jnp.power(jnp.maximum(1.0 - pt, 0.0), gamma)
    loss1 = -jnp.sum(jnp.where(valid, los * w, 0.0))

    y0 = jnp.maximum(y, 0.0)
    gram = y0.T @ y0
    i_idx, j_idx = jnp.triu_indices(y.shape[1], k=1)
    y_pair = jnp.minimum(gram[i_idx, j_idx], 1.0)
    x_max = jnp.max(z, axis=0)
    bce = jnp.maximum(x_max, 0.0) - x_max * y_pair + jnp.log1p(
        jnp.exp(-jnp.abs(x_max)))
    loss2 = jnp.mean(bce)
    return WEIGHT_A * loss1 + WEIGHT_B * loss2


if __name__ == "__main__":
    key = jax.random.PRNGKey(0)

    def run_case(B, C, Bz, max_pair_tile):
        P = C * (C - 1) // 2
        kx, ky, kz = jax.random.split(jax.random.fold_in(key, 1000 * B + C), 3)
        x = jax.random.normal(kx, (B, C), dtype=jnp.float32)
        # multilabel targets in {-1, 0, 1} (-1 = ignore)
        y = (jax.random.randint(ky, (B, C), 0, 3) - 1).astype(jnp.float32)
        z = jax.random.normal(kz, (Bz, P), dtype=jnp.float32)

        out = loss_mixture(x, y, z, max_pair_tile=max_pair_tile)
        jax.block_until_ready(out)

        ref = _reference(x, y, z)
        assert bool(jnp.isfinite(out)), out
        assert jnp.allclose(out, ref, rtol=1e-3, atol=1e-3), (out, ref)

    # Small case from the module defaults (single tile, single split).
    run_case(B=8, C=16, Bz=8, max_pair_tile=MAX_TP)
    # Slightly larger case exercising multi-tile pair axis, ragged last z tile,
    # the 2-way core split, and skipped (clamped) tiles.
    run_case(B=4, C=48, Bz=4, max_pair_tile=256)

    print("KERNEL_OK")
</pallas_src>

<mosaic_0001>
module attributes {stable_mosaic.version = 11 : i64} {
  func.func private @main(%arg0: i32) attributes {dimension_semantics = [#tpu.dimension_semantics<core_parallel>], iteration_bounds = array<i64: 2>, tpu.core_type = #tpu.core_type<sc_scalar_subcore>, window_params = []} {
    return
  }
}

module attributes {stable_mosaic.version = 11 : i64} {
  func.func private @main(%arg0: i32) attributes {dimension_semantics = [#tpu.dimension_semantics<core_parallel>], iteration_bounds = array<i64: 2>, tpu.core_type = #tpu.core_type<sc_scalar_subcore>, window_params = []} {
    return
  }
}

module attributes {stable_mosaic.version = 11 : i64} {
  func.func @kernel(%arg0: i32, %arg1: i32, %arg2: memref<8x128xf32, #tpu.memory_space<vmem>>, %arg3: memref<8x128xf32, #tpu.memory_space<vmem>>, %arg4: memref<8x128xf32, #tpu.memory_space<vmem>>, %arg5: memref<1x128xf32, #tpu.memory_space<vmem>>, %arg6: memref<1x8x128xf32, #tpu.memory_space<vmem>>, %arg7: memref<1x128xf32, #tpu.memory_space<vmem>>, %arg8: memref<1x128xf32, #tpu.memory_space<vmem>>) attributes {dimension_semantics = [#tpu.dimension_semantics<parallel>, #tpu.dimension_semantics<arbitrary>], iteration_bounds = array<i64: 1, 1>, scalar_prefetch = 0 : i64, scratch_operands = 2 : i64, tpu.core_type = #tpu.core_type<tc>, window_params = [{transform_indices = @transform_0, window_bounds = array<i64: 8, 128>}, {transform_indices = @transform_1, window_bounds = array<i64: 8, 128>}, {transform_indices = @transform_2, window_bounds = array<i64: 8, 128>}, {transform_indices = @transform_3, window_bounds = array<i64: 1, 128>}, {transform_indices = @transform_4, window_bounds = array<i64: 1, 8, 128>}]} {
    %c0_i32 = arith.constant 0 : i32
    %0 = arith.cmpi eq, %arg1, %c0_i32 : i32
    %1 = arith.extui %0 : i1 to i32
    %c0_i32_0 = arith.constant 0 : i32
    %2 = arith.cmpi ne, %1, %c0_i32_0 : i32
    scf.if %2 {
      %cst = arith.constant 0.000000e+00 : f32
      %20 = vector.broadcast %cst : f32 to vector<1x128xf32>
      %c0 = arith.constant 0 : index
      %c0_10 = arith.constant 0 : index
      %21 = vector.load %arg7[%c0, %c0_10] : memref<1x128xf32, #tpu.memory_space<vmem>>, vector<1x128xf32>
      tpu.vector_store %arg7[%c0, %c0_10], %20 {strides = array<i32>} : memref<1x128xf32, #tpu.memory_space<vmem>>, vector<1x128xf32>,
      %cst_11 = arith.constant 0.000000e+00 : f32
      %22 = vector.broadcast %cst_11 : f32 to vector<1x128xf32>
      %c0_12 = arith.constant 0 : index
      %c0_13 = arith.constant 0 : index
      %23 = vector.load %arg8[%c0_12, %c0_13] : memref<1x128xf32, #tpu.memory_space<vmem>>, vector<1x128xf32>
      tpu.vector_store %arg8[%c0_12, %c0_13], %22 {strides = array<i32>} : memref<1x128xf32, #tpu.memory_space<vmem>>, vector<1x128xf32>,
    } else {
    }
    %c1_i32 = arith.constant 1 : i32
    %3 = arith.muli %arg0, %c1_i32 : i32
    %4 = arith.addi %3, %arg1 : i32
    %c1_i32_1 = arith.constant 1 : i32
    %5 = arith.cmpi slt, %arg1, %c1_i32_1 : i32
    %c1_i32_2 = arith.constant 1 : i32
    %6 = arith.cmpi slt, %4, %c1_i32_2 : i32
    %7 = arith.andi %5, %6 : i1
    %8 = arith.extui %7 : i1 to i32
    %c0_i32_3 = arith.constant 0 : i32
    %9 = arith.cmpi ne, %8, %c0_i32_3 : i32
    scf.if %9 {
      %c0 = arith.constant 0 : index
      %c0_10 = arith.constant 0 : index
      %20 = vector.load %arg2[%c0, %c0_10] : memref<8x128xf32, #tpu.memory_space<vmem>>, vector<8x128xf32>
      %c0_11 = arith.constant 0 : index
      %c0_12 = arith.constant 0 : index
      %21 = vector.load %arg3[%c0_11, %c0_12] : memref<8x128xf32, #tpu.memory_space<vmem>>, vector<8x128xf32>
      %22 = arith.negf %20 : vector<8x128xf32>
      %23 = math.exp %22 : vector<8x128xf32>
      %cst = arith.constant 1.000000e+00 : f32
      %24 = vector.broadcast %cst : f32 to vector<8x128xf32>
      %25 = arith.addf %24, %23 : vector<8x128xf32>
      %26 = arith.divf %24, %25 : vector<8x128xf32>
      %cst_13 = arith.constant 1.000000e+00 : f32
      %27 = vector.broadcast %cst_13 : f32 to vector<8x128xf32>
      %28 = arith.subf %27, %26 : vector<8x128xf32>
      %cst_14 = arith.constant -1.000000e+00 : f32
      %29 = vector.broadcast %cst_14 : f32 to vector<8x128xf32>
      %30 = arith.cmpf one, %21, %29 : vector<8x128xf32>
      %cst_15 = arith.constant 5.000000e-02 : f32
      %31 = vector.broadcast %cst_15 : f32 to vector<8x128xf32>
      %32 = arith.addf %28, %31 : vector<8x128xf32>
      %cst_16 = arith.constant 1.000000e+00 : f32
      %33 = vector.broadcast %cst_16 : f32 to vector<8x128xf32>
      %34 = arith.minimumf %32, %33 : vector<8x128xf32>
      %cst_17 = arith.constant 9.99999997E-7 : f32
      %35 = vector.broadcast %cst_17 : f32 to vector<8x128xf32>
      %36 = arith.maximumf %26, %35 : vector<8x128xf32>
      %37 = math.log %36 : vector<8x128xf32>
      %38 = arith.mulf %21, %37 : vector<8x128xf32>
      %cst_18 = arith.constant 1.000000e+00 : f32
      %39 = vector.broadcast %cst_18 : f32 to vector<8x128xf32>
      %40 = arith.subf %39, %21 : vector<8x128xf32>
      %cst_19 = arith.constant 9.99999997E-7 : f32
      %41 = vector.broadcast %cst_19 : f32 to vector<8x128xf32>
      %42 = arith.maximumf %34, %41 : vector<8x128xf32>
      %43 = math.log %42 : vector<8x128xf32>
      %44 = arith.mulf %40, %43 : vector<8x128xf32>
      %45 = arith.addf %38, %44 : vector<8x128xf32>
      %46 = arith.mulf %26, %21 : vector<8x128xf32>
      %cst_20 = arith.constant 1.000000e+00 : f32
      %47 = vector.broadcast %cst_20 : f32 to vector<8x128xf32>
      %48 = arith.subf %47, %21 : vector<8x128xf32>
      %49 = arith.mulf %34, %48 : vector<8x128xf32>
      %50 = arith.addf %46, %49 : vector<8x128xf32>
      %cst_21 = arith.constant 1.000000e+00 : f32
      %51 = vector.broadcast %cst_21 : f32 to vector<8x128xf32>
      %52 = arith.subf %51, %50 : vector<8x128xf32>
      %53 = arith.mulf %52, %52 : vector<8x128xf32>
      %cst_22 = arith.constant 5.000000e-01 : f32
      %54 = vector.broadcast %cst_22 : f32 to vector<8x128xf32>
      %55 = arith.cmpf ogt, %21, %54 : vector<8x128xf32>
      %56 = arith.mulf %53, %53 : vector<8x128xf32>
      %57 = arith.select %55, %52, %56 : vector<8x128xi1>, vector<8x128xf32>
      %58 = arith.mulf %45, %57 : vector<8x128xf32>
      %cst_23 = arith.constant 0.000000e+00 : f32
      %59 = vector.broadcast %cst_23 : f32 to vector<8x128xf32>
      %60 = arith.select %30, %58, %59 : vector<8x128xi1>, vector<8x128xf32>
      %c0_24 = arith.constant 0 : index
      %c0_25 = arith.constant 0 : index
      %61 = vector.load %arg7[%c0_24, %c0_25] : memref<1x128xf32, #tpu.memory_space<vmem>>, vector<1x128xf32>
      %cst_26 = arith.constant dense<0.000000e+00> : vector<128xf32>
      %62 = vector.multi_reduction <add>, %60, %cst_26 [0] : vector<8x128xf32> to vector<128xf32>
      %63 = vector.shape_cast %62 : vector<128xf32> to vector<1x128xf32>
      %64 = arith.addf %61, %63 : vector<1x128xf32>
      %c0_27 = arith.constant 0 : index
      %c0_28 = arith.constant 0 : index
      %65 = vector.load %arg7[%c0_27, %c0_28] : memref<1x128xf32, #tpu.memory_space<vmem>>, vector<1x128xf32>
      tpu.vector_store %arg7[%c0_27, %c0_28], %64 {strides = array<i32>} : memref<1x128xf32, #tpu.memory_space<vmem>>, vector<1x128xf32>,
    } else {
    }
    %c1_i32_4 = arith.constant 1 : i32
    %10 = arith.muli %arg0, %c1_i32_4 : i32
    %11 = arith.addi %10, %arg1 : i32
    %c1_i32_5 = arith.constant 1 : i32
    %12 = arith.cmpi slt, %arg1, %c1_i32_5 : i32
    %c1_i32_6 = arith.constant 1 : i32
    %13 = arith.cmpi slt, %11, %c1_i32_6 : i32
    %14 = arith.andi %12, %13 : i1
    %15 = arith.extui %14 : i1 to i32
    %c0_i32_7 = arith.constant 0 : i32
    %16 = arith.cmpi ne, %15, %c0_i32_7 : i32
    scf.if %16 {
      %c0 = arith.constant 0 : index
      %c0_10 = arith.constant 0 : index
      %20 = vector.load %arg4[%c0, %c0_10] : memref<8x128xf32, #tpu.memory_space<vmem>>, vector<8x128xf32>
      %c0_11 = arith.constant 0 : index
      %c0_12 = arith.constant 0 : index
      %21 = vector.load %arg5[%c0_11, %c0_12] : memref<1x128xf32, #tpu.memory_space<vmem>>, vector<1x128xf32>
      %cst = arith.constant dense<0xFF800000> : vector<128xf32>
      %22 = vector.multi_reduction <maximumf>, %20, %cst [0] : vector<8x128xf32> to vector<128xf32>
      %23 = vector.shape_cast %22 : vector<128xf32> to vector<1x128xf32>
      %cst_13 = arith.constant 0.000000e+00 : f32
      %24 = vector.broadcast %cst_13 : f32 to vector<1x128xf32>
      %25 = arith.maximumf %23, %24 : vector<1x128xf32>
      %26 = arith.mulf %23, %21 : vector<1x128xf32>
      %27 = arith.subf %25, %26 : vector<1x128xf32>
      %28 = math.absf %23 : vector<1x128xf32>
      %cst_14 = arith.constant 0.000000e+00 : f32
      %29 = vector.broadcast %cst_14 : f32 to vector<1x128xf32>
      %30 = arith.subf %29, %28 : vector<1x128xf32>
      %31 = math.exp %30 : vector<1x128xf32>
      %cst_15 = arith.constant 1.000000e+00 : f32
      %32 = vector.broadcast %cst_15 : f32 to vector<1x128xf32>
      %33 = arith.addf %32, %31 : vector<1x128xf32>
      %34 = math.log %33 : vector<1x128xf32>
      %35 = arith.addf %27, %34 : vector<1x128xf32>
      %36 = tpu.iota {dimensions = array<i32: 1>} : vector<1x128xi32>
      %c128_i32 = arith.constant 128 : i32
      %37 = arith.muli %11, %c128_i32 : i32
      %38 = vector.broadcast %37 : i32 to vector<1x128xi32>
      %39 = arith.addi %36, %38 : vector<1x128xi32>
      %c120_i32 = arith.constant 120 : i32
      %40 = vector.broadcast %c120_i32 : i32 to vector<1x128xi32>
      %41 = arith.cmpi slt, %39, %40 : vector<1x128xi32>
      %c0_16 = arith.constant 0 : index
      %c0_17 = arith.constant 0 : index
      %42 = vector.load %arg8[%c0_16, %c0_17] : memref<1x128xf32, #tpu.memory_space<vmem>>, vector<1x128xf32>
      %cst_18 = arith.constant 0.000000e+00 : f32
      %43 = vector.broadcast %cst_18 : f32 to vector<1x128xf32>
      %44 = arith.select %41, %35, %43 : vector<1x128xi1>, vector<1x128xf32>
      %45 = arith.addf %42, %44 : vector<1x128xf32>
      %c0_19 = arith.constant 0 : index
      %c0_20 = arith.constant 0 : index
      %46 = vector.load %arg8[%c0_19, %c0_20] : memref<1x128xf32, #tpu.memory_space<vmem>>, vector<1x128xf32>
      tpu.vector_store %arg8[%c0_19, %c0_20], %45 {strides = array<i32>} : memref<1x128xf32, #tpu.memory_space<vmem>>, vector<1x128xf32>,
    } else {
    }
    %c0_i32_8 = arith.constant 0 : i32
    %17 = arith.cmpi eq, %arg1, %c0_i32_8 : i32
    %18 = arith.extui %17 : i1 to i32
    %c0_i32_9 = arith.constant 0 : i32
    %19 = arith.cmpi ne, %18, %c0_i32_9 : i32
    scf.if %19 {
      %c0 = arith.constant 0 : index
      %c0_10 = arith.constant 0 : index
      %20 = vector.load %arg7[%c0, %c0_10] : memref<1x128xf32, #tpu.memory_space<vmem>>, vector<1x128xf32>
      %21 = vector.shape_cast %20 : vector<1x128xf32> to vector<1x1x128xf32>
      %cst = arith.constant dense<0.000000e+00> : vector<1xf32>
      %22 = vector.multi_reduction <add>, %21, %cst [1, 2] : vector<1x1x128xf32> to vector<1xf32>
      %23 = vector.shape_cast %22 : vector<1xf32> to vector<1x1x1xf32>
      %24 = vector.extract %23[0, 0, 0] : f32 from vector<1x1x1xf32>
      %cst_11 = arith.constant 0.000000e+00 : f32
      %25 = arith.subf %cst_11, %24 : f32
      %c0_12 = arith.constant 0 : index
      %c0_13 = arith.constant 0 : index
      %26 = vector.load %arg8[%c0_12, %c0_13] : memref<1x128xf32, #tpu.memory_space<vmem>>, vector<1x128xf32>
      %27 = vector.shape_cast %26 : vector<1x128xf32> to vector<1x1x128xf32>
      %cst_14 = arith.constant dense<0.000000e+00> : vector<1xf32>
      %28 = vector.multi_reduction <add>, %27, %cst_14 [1, 2] : vector<1x1x128xf32> to vector<1xf32>
      %29 = vector.shape_cast %28 : vector<1xf32> to vector<1x1x1xf32>
      %30 = vector.extract %29[0, 0, 0] : f32 from vector<1x1x1xf32>
      %cst_15 = arith.constant 0.00833333377 : f32
      %31 = arith.mulf %30, %cst_15 : f32
      %cst_16 = arith.constant 1.000000e-01 : f32
      %32 = arith.mulf %cst_16, %25 : f32
      %cst_17 = arith.constant 1.000000e+00 : f32
      %33 = arith.mulf %cst_17, %31 : f32
      %34 = arith.addf %32, %33 : f32
      %35 = vector.broadcast %34 : f32 to vector<1x8x128xf32>
      %c0_18 = arith.constant 0 : index
      %c0_19 = arith.constant 0 : index
      %c0_20 = arith.constant 0 : index
      %36 = vector.load %arg6[%c0_18, %c0_19, %c0_20] : memref<1x8x128xf32, #tpu.memory_space<vmem>>, vector<1x8x128xf32>
      tpu.vector_store %arg6[%c0_18, %c0_19, %c0_20], %35 {strides = array<i32>} : memref<1x8x128xf32, #tpu.memory_space<vmem>>, vector<1x8x128xf32>,
    } else {
    }
    return
  }
  func.func @transform_0(%arg0: i32, %arg1: i32) -> (i32, i32) {
    %c1_i32 = arith.constant 1 : i32
    %0 = arith.muli %arg0, %c1_i32 : i32
    %1 = arith.addi %0, %arg1 : i32
    %c0_i32 = arith.constant 0 : i32
    %2 = arith.minsi %1, %c0_i32 : i32
    %c0_i32_0 = arith.constant 0 : i32
    %c0_i32_1 = arith.constant 0 : i32
    return %2, %c0_i32_0 : i32, i32
  }
  func.func @transform_1(%arg0: i32, %arg1: i32) -> (i32, i32) {
    %c1_i32 = arith.constant 1 : i32
    %0 = arith.muli %arg0, %c1_i32 : i32
    %1 = arith.addi %0, %arg1 : i32
    %c0_i32 = arith.constant 0 : i32
    %2 = arith.minsi %1, %c0_i32 : i32
    %c0_i32_0 = arith.constant 0 : i32
    %c0_i32_1 = arith.constant 0 : i32
    return %2, %c0_i32_0 : i32, i32
  }
  func.func @transform_2(%arg0: i32, %arg1: i32) -> (i32, i32) {
    %c1_i32 = arith.constant 1 : i32
    %0 = arith.muli %arg0, %c1_i32 : i32
    %1 = arith.addi %0, %arg1 : i32
    %c0_i32 = arith.constant 0 : i32
    %2 = arith.minsi %1, %c0_i32 : i32
    %c0_i32_0 = arith.constant 0 : i32
    %c0_i32_1 = arith.constant 0 : i32
    return %c0_i32_0, %2 : i32, i32
  }
  func.func @transform_3(%arg0: i32, %arg1: i32) -> (i32, i32) {
    %c1_i32 = arith.constant 1 : i32
    %0 = arith.muli %arg0, %c1_i32 : i32
    %1 = arith.addi %0, %arg1 : i32
    %c0_i32 = arith.constant 0 : i32
    %2 = arith.minsi %1, %c0_i32 : i32
    %c0_i32_0 = arith.constant 0 : i32
    %c0_i32_1 = arith.constant 0 : i32
    return %c0_i32_0, %2 : i32, i32
  }
  func.func @transform_4(%arg0: i32, %arg1: i32) -> (i32, i32, i32) {
    %c0_i32 = arith.constant 0 : i32
    %c0_i32_0 = arith.constant 0 : i32
    %c0_i32_1 = arith.constant 0 : i32
    return %arg0, %c0_i32, %c0_i32_0 : i32, i32, i32
  }
}

</mosaic_0001>

<llo_original>
// kernel: loss_mixture.1
$region0: #{loss_mixture.1}
  #allocation0 [shape = 'u32[]', space=smem, size = 0x4, offset = 0x4, fixed_abs, tag = 'smem constant byte address 0x4 - core index']
  #allocation1 [shape = 'u32[144,128]{1,0:T(1,128)}', space=vmem, size = 0x12000, scoped, tag = 'internal scratch']
  #allocation2 [shape = 'f32[1,128]{1,0:T(1,128)}', space=vmem, size = 0x200, scoped, tag = 'scratch operand']
  #allocation3 [shape = 'f32[1,128]{1,0:T(1,128)}', space=vmem, size = 0x200, scoped, tag = 'scratch operand']
  %s0 = inlined_call_operand.vmem [shape: f32[8,128], index: 0, kind: input, shape index: {}]
  %s1 = inlined_call_operand.vmem [shape: f32[8,128], index: 1, kind: input, shape index: {}]
  %s2 = inlined_call_operand.vmem [shape: f32[8,120], index: 2, kind: input, shape index: {}]
  %s3 = inlined_call_operand.vmem [shape: f32[1,120], index: 3, kind: input, shape index: {}]
  %s4 = inlined_call_operand.vmem [shape: f32[1,8,128], index: 4, kind: output, shape index: {}]
  %s5 = sld [smem:[#allocation0]]
  $region38: #{loss_mixture.1} parent=0
    _
  %s7 = ssub.s32 1, %s5
  %s8 = scalar_select 0, %s7, %s5
  // Predicated region
  $region2: #{loss_mixture.1} parent=0 // pred_check
    _
  $region3: #{loss_mixture.1} parent=0 // pred_check_branch
    %10 = sbr.rel (0) target = $region5
  $region4: #{loss_mixture.1} parent=0 // pred_region
    %s11 = sadd.s32 0, 0
    %p12 = scmp.lt.s32.totalorder %s11, 0
    %s13 = scalar_select %p12, %s11, 0
    %p14 = scmp.lt.s32.totalorder %s13, 0
    %s15 = scalar_select %p14, %s13, 0
    %s16 = smul.addr %s15, 8
    %s17 = scalar_lea.vmem %s0, %s16
    %s18 = sadd.s32 0, 0
    %p19 = scmp.lt.s32.totalorder %s18, 0
    %s20 = scalar_select %p19, %s18, 0
  $region5: #{loss_mixture.1} parent=0 // pred_fallthru
    _
  // Predicated region
  $region6: #{loss_mixture.1} parent=0 // pred_check
    _
  $region7: #{loss_mixture.1} parent=0 // pred_check_branch
    %22 = sbr.rel (0) target = $region9
  $region8: #{loss_mixture.1} parent=0 // pred_region
    %s23 = sadd.s32 0, 0
    %p24 = scmp.lt.s32.totalorder %s23, 0
    %s25 = scalar_select %p24, %s23, 0
    %p26 = scmp.lt.s32.totalorder %s25, 0
    %s27 = scalar_select %p26, %s25, 0
    %s28 = smul.addr %s27, 8
    %s29 = scalar_lea.vmem %s1, %s28
    %s30 = sadd.s32 0, 0
    %p31 = scmp.lt.s32.totalorder %s30, 0
    %s32 = scalar_select %p31, %s30, 0
  $region9: #{loss_mixture.1} parent=0 // pred_fallthru
    _
  // Predicated region
  $region10: #{loss_mixture.1} parent=0 // pred_check
    _
  $region11: #{loss_mixture.1} parent=0 // pred_check_branch
    %34 = sbr.rel (0) target = $region13
  $region12: #{loss_mixture.1} parent=0 // pred_region
    %s35 = sadd.s32 0, 0
    %p36 = scmp.lt.s32.totalorder %s35, 0
    %s37 = scalar_select %p36, %s35, 0
    %p38 = scmp.lt.s32.totalorder %s37, 0
    %s39 = scalar_select %p38, %s37, 0
    %s40 = smul.addr %s39, 8
    %s41 = scalar_lea.vmem %s2, %s40
    %s42 = sadd.s32 0, 0
    %p43 = scmp.lt.s32.totalorder %s42, 0
    %s44 = scalar_select %p43, %s42, 0
  $region13: #{loss_mixture.1} parent=0 // pred_fallthru
    _
  // Predicated region
  $region14: #{loss_mixture.1} parent=0 // pred_check
    _
  $region15: #{loss_mixture.1} parent=0 // pred_check_branch
    %46 = sbr.rel (0) target = $region17
  $region16: #{loss_mixture.1} parent=0 // pred_region
    %s47 = sadd.s32 0, 0
    %p48 = scmp.lt.s32.totalorder %s47, 0
    %s49 = scalar_select %p48, %s47, 0
    %p50 = scmp.lt.s32.totalorder %s49, 0
    %s51 = scalar_select %p50, %s49, 0
    %s52 = scalar_lea.vmem %s3, %s51
    %s53 = sadd.s32 0, 0
    %p54 = scmp.lt.s32.totalorder %s53, 0
    %s55 = scalar_select %p54, %s53, 0
  $region17: #{loss_mixture.1} parent=0 // pred_fallthru
    _
  %s56 = sadd.s32 0, 0
  %p57 = scmp.lt.s32.totalorder %s56, 0
  %s58 = scalar_select %p57, %s56, 0
  %p59 = scmp.lt.s32.totalorder %s58, 0
  %s60 = scalar_select %p59, %s58, 0
  %s61 = smul.addr %s60, 8
  %s62 = scalar_lea.vmem %s0, %s61
  %s63 = sadd.s32 0, 0
  %p64 = scmp.lt.s32.totalorder %s63, 0
  %s65 = scalar_select %p64, %s63, 0
  %p66 = scmp.lt.s32.totalorder %s65, 0
  %s67 = scalar_select %p66, %s65, 0
  %s68 = smul.addr %s67, 8
  %s69 = scalar_lea.vmem %s1, %s68
  %s70 = sadd.s32 0, 0
  %p71 = scmp.lt.s32.totalorder %s70, 0
  %s72 = scalar_select %p71, %s70, 0
  %p73 = scmp.lt.s32.totalorder %s72, 0
  %s74 = scalar_select %p73, %s72, 0
  %s75 = smul.addr %s74, 8
  %s76 = scalar_lea.vmem %s2, %s75
  %s77 = sadd.s32 0, 0
  %p78 = scmp.lt.s32.totalorder %s77, 0
  %s79 = scalar_select %p78, %s77, 0
  %p80 = scmp.lt.s32.totalorder %s79, 0
  %s81 = scalar_select %p80, %s79, 0
  %s82 = scalar_lea.vmem %s3, %s81
  %s83 = sadd.s32 0, 0
  %p84 = scmp.lt.s32.totalorder %s83, 0
  %s85 = scalar_select %p84, %s83, 0
  %p86 = scmp.lt.s32.totalorder %s85, 0
  %s87 = scalar_select %p86, %s85, 0
  %s88 = smul.addr %s87, 8
  %s89 = scalar_lea.vmem %s0, %s88
  %s90 = sadd.s32 0, 0
  %p91 = scmp.lt.s32.totalorder %s90, 0
  %s92 = scalar_select %p91, %s90, 0
  %s93 = sadd.s32 0, 0
  %p94 = scmp.lt.s32.totalorder %s93, 0
  %s95 = scalar_select %p94, %s93, 0
  %p96 = scmp.lt.s32.totalorder %s95, 0
  %s97 = scalar_select %p96, %s95, 0
  %s98 = smul.addr %s97, 8
  %s99 = scalar_lea.vmem %s1, %s98
  %s100 = sadd.s32 0, 0
  %p101 = scmp.lt.s32.totalorder %s100, 0
  %s102 = scalar_select %p101, %s100, 0
  %s103 = sadd.s32 0, 0
  %p104 = scmp.lt.s32.totalorder %s103, 0
  %s105 = scalar_select %p104, %s103, 0
  %p106 = scmp.lt.s32.totalorder %s105, 0
  %s107 = scalar_select %p106, %s105, 0
  %s108 = smul.addr %s107, 8
  %s109 = scalar_lea.vmem %s2, %s108
  %s110 = sadd.s32 0, 0
  %p111 = scmp.lt.s32.totalorder %s110, 0
  %s112 = scalar_select %p111, %s110, 0
  %s113 = sadd.s32 0, 0
  %p114 = scmp.lt.s32.totalorder %s113, 0
  %s115 = scalar_select %p114, %s113, 0
  %p116 = scmp.lt.s32.totalorder %s115, 0
  %s117 = scalar_select %p116, %s115, 0
  %s118 = scalar_lea.vmem %s3, %s117
  %s119 = sadd.s32 0, 0
  %p120 = scmp.lt.s32.totalorder %s119, 0
  %s121 = scalar_select %p120, %s119, 0
  %p122 = scmp.eq.s32.totalorder 0, 0
  // Predicated region
  $region18: #{loss_mixture.1} parent=0 // pred_check
    %p123 = pneg %p122
  $region19: #{loss_mixture.1} parent=0 // pred_check_branch
    %125 = sbr.rel (%p123) target = $region21
  $region20: #{loss_mixture.1} parent=0 // pred_region
    %126 = vst [vmem:[#allocation2] sm:$0x1] 0.0
    %127 = vst [vmem:[#allocation3] sm:$0x1] 0.0
  $region21: #{loss_mixture.1} parent=0 // pred_fallthru
    _
  %s128 = sadd.s32 0, 0
  %p129 = scmp.lt.s32.totalorder 0, 1
  %p130 = scmp.lt.s32.totalorder %s128, 1
  %p131 = pnand %p129, %p130
  %p132 = pneg %p131
  // Predicated region
  $region22: #{loss_mixture.1} parent=0 // pred_check
    _
  $region23: #{loss_mixture.1} parent=0 // pred_check_branch
    %134 = sbr.rel (%p131) target = $region25
  $region24: #{loss_mixture.1} parent=0 // pred_region
    %v135 = vld [vmem:[%s89] sm:$0xff]
    %v136 = vld [vmem:[%s99] sm:$0xff]
    %v137 = vxor.u32 %v135, 2147483648
    %v138 = vmul.f32 %v137, 1.442695
    %v139 = vpow.pop %v138
    %v140 = vadd.f32 %v139, 1.0
    %v141 = vrcp.pop %v140
    %v142 = vmul.f32 1.0, %v141
    %v143 = vsub.f32 1.0, %v142
    %vm144 = vcmp.ne.f32.partialorder %v136, -1.0
    %v145 = vadd.f32 %v143, 0.05
    %v146 = vmin.f32 %v145, 1.0
    %v147 = vmax.f32 %v142, 1e-06
    %v148 = vlog2.pop %v147
    %v149 = vmul.f32 %v148, 0.6931472
    %v150 = vmul.f32 %v136, %v149
    %v151 = vsub.f32 1.0, %v136
    %v152 = vmax.f32 %v146, 1e-06
    %v153 = vlog2.pop %v152
    %v154 = vmul.f32 %v153, 0.6931472
    %v155 = vmul.f32 %v151, %v154
    %v156 = vadd.f32 %v150, %v155
    %v157 = vmul.f32 %v142, %v136
    %v158 = vmul.f32 %v146, %v151
    %v159 = vadd.f32 %v157, %v158
    %v160 = vsub.f32 1.0, %v159
    %v161 = vmul.f32 %v160, %v160
    %vm162 = vcmp.gt.f32.partialorder %v136, 0.5
    %v163 = vmul.f32 %v161, %v161
    %v164 = vsel %vm162, %v160, %v163
    %v165 = vmul.f32 %v156, %v164
    %v166 = vsel %vm144, %v165, 0.0
    %v167 = vld [vmem:[#allocation2] sm:$0x1]
    %v168 = vrot.slane %v166, 4
    %v169 = vadd.f32 %v166, %v168
    %v170 = vrot.slane %v169, 2
    %v171 = vadd.f32 %v169, %v170
    %v172 = vrot.slane %v171, 1
    %v173 = vadd.f32 %v171, %v172
    %v174 = vadd.f32 %v167, %v173
    %175 = vst [vmem:[#allocation2] sm:$0x1] %v174
    %v176 = vld [vmem:[%s109] sm:$0xff]
    %v177 = vld [vmem:[%s118] sm:$0x1]
    %v178 = vrot.slane %v176, 4
    %v179 = vmax.f32 %v176, %v178
    %v180 = vrot.slane %v179, 2
    %v181 = vmax.f32 %v179, %v180
    %v182 = vrot.slane %v181, 1
    %v183 = vmax.f32 %v181, %v182
    %v184 = vmax.f32 %v183, 0.0
    %v185 = vmul.f32 %v183, %v177
    %v186 = vsub.f32 %v184, %v185
    %v187 = vand.u32 2147483647, %v183
    %v188 = vsub.f32 0.0, %v187
    %v189 = vmul.f32 %v188, 1.442695
    %v190 = vpow.pop %v189
    %v191 = vadd.f32 %v190, 1.0
    %v192 = vlog2.pop %v191
    %v193 = vmul.f32 %v192, 0.6931472
    %v194 = vadd.f32 %v186, %v193
    %v195 = vlaneseq
    %v196 = vand.u32 %v195, 127
    %s197 = smul.u32 %s128, 128
    %v198 = vstv %s197
    %v199 = vadd.s32 %v196, %v198
    %vm200 = vcmp.lt.s32.totalorder %v199, 120
    %v201 = vld [vmem:[#allocation3] sm:$0x1]
    %v202 = vsel %vm200, %v194, 0.0
    %v203 = vadd.f32 %v201, %v202
    %204 = vst [vmem:[#allocation3] sm:$0x1] %v203
  $region25: #{loss_mixture.1} parent=0 // pred_fallthru
    _
  // Predicated region
  $region26: #{loss_mixture.1} parent=0 // pred_check
    %p205 = pneg %p122
  $region27: #{loss_mixture.1} parent=0 // pred_check_branch
    %207 = sbr.rel (%p205) target = $region29
  $region28: #{loss_mixture.1} parent=0 // pred_region
    %v208 = vld [vmem:[#allocation2] sm:$0x1]
    %vm209 = vcmask 1040384
    %v210 = vsel %vm209, %v208, 0.0
    %211 = vadd.xlane.f32.xlu0 %v210
    %v212 = vpop.xlane.xlu0 %211
    %v213 = vrot.slane %v212, 4
    %v214 = vadd.f32 %v212, %v213
    %v215 = vrot.slane %v214, 2
    %v216 = vadd.f32 %v214, %v215
    %v217 = vrot.slane %v216, 1
    %v218 = vadd.f32 %v216, %v217
    %s219 = vtos %v218
    %s220 = ssub.f32 0.0, %s219
    %v221 = vld [vmem:[#allocation3] sm:$0x1]
    %v222 = vsel %vm209, %v221, 0.0
    %223 = vadd.xlane.f32.xlu0 %v222
    %v224 = vpop.xlane.xlu0 %223
    %v225 = vrot.slane %v224, 4
    %v226 = vadd.f32 %v224, %v225
    %v227 = vrot.slane %v226, 2
    %v228 = vadd.f32 %v226, %v227
    %v229 = vrot.slane %v228, 1
    %v230 = vadd.f32 %v228, %v229
    %s231 = vtos %v230
    %s232 = smul.f32 %s231, 0.008333334
    %s233 = smul.f32 %s220, 0.1
    %s234 = sadd.f32 %s233, %s232
    %v235 = vstv %s234
    %236 = vst [vmem:[%s4] sm:$0xff] %v235
  $region29: #{loss_mixture.1} parent=0 // pred_fallthru
    _
  // Predicated region
  $region30: #{loss_mixture.1} parent=0 // pred_check
    _
  $region31: #{loss_mixture.1} parent=0 // pred_check_branch
    %238 = sbr.rel (0) target = $region33
  $region32: #{loss_mixture.1} parent=0 // pred_region
    _
  $region33: #{loss_mixture.1} parent=0 // pred_fallthru
    _
  // Predicated region
  $region34: #{loss_mixture.1} parent=0 // pred_check
    _
  $region35: #{loss_mixture.1} parent=0 // pred_check_branch
    %240 = sbr.rel (0) target = $region37
  $region36: #{loss_mixture.1} parent=0 // pred_region
    _
  $region37: #{loss_mixture.1} parent=0 // pred_fallthru
    _

</llo_original>
